<compile_context>
chip_gen: v5e
topology: v5e:2x2
jax: 0.10.0
libtpu: 0.0.40
codegen_flags: <defaults>
</compile_context>

<pallas_src>
import functools

import jax
import jax.numpy as jnp
from jax.experimental import pallas as pl
from jax.experimental.pallas import tpu as pltpu

LANE = 128   # vreg lane width
ROW = 16     # bf16 sublane packing (covers f32's 8 as well)


def _round_up(x, m):
    return (x + m - 1) // m * m


# ----------------------------- Pallas kernel ------------------------------- #

def _make_fused_mlp_kernel(n_hidden, has_output):
    """Kernel computing the entire MLP on one batch tile.

    Ref order: x, (w_i, shift_i) * n_hidden, [w_out, b_out], o_ref
    """

    def kernel(*refs):
        x_ref = refs[0]
        pos = 1
        h = x_ref[...]                                   # (TB, D) bf16
        for li in range(n_hidden):
            w_ref = refs[pos]
            s_ref = refs[pos + 1]
            pos += 2
            y = jnp.dot(h, w_ref[...], preferred_element_type=jnp.float32)
            y = jnp.maximum(y + s_ref[...], 0.0)         # folded BN + ReLU
            # Dropout: identity in eval mode.
            if li + 1 < n_hidden or has_output:
                h = y.astype(jnp.bfloat16)               # bf16 on-chip activations
            else:
                h = y
        if has_output:
            w_ref = refs[pos]
            b_ref = refs[pos + 1]
            pos += 2
            y = jnp.dot(h, w_ref[...], preferred_element_type=jnp.float32) + b_ref[...]
            o_ref = refs[pos]
            # Only lane 0 is the real width-1 output.  Transpose via the XLU and
            # store a lane-dense (1, TB) strip -> ~128x smaller HBM writeback.
            strip = jnp.transpose(y)[0:1, :]             # (1, TB)
            o_ref[...] = strip[None]                     # (1, 1, TB)
        else:
            o_ref = refs[pos]
            o_ref[...] = h.astype(o_ref.dtype)

    return kernel


# --------------------------- parameter construction ------------------------ #

def init_mlp_params(key, input_dim, hidden_dims, output_layer=True):
    """Deterministic init mirroring the PyTorch module's shapes.

    Returns (kernel_params, ref_params):
      kernel_params: BN-folded, lane-padded (N side only), bf16 weights.
      ref_params:    unfolded / unpadded f32 parameters for a pure-JAX reference.
    """
    eps = 1e-5
    k_hidden, r_hidden = [], []
    in_dim = input_dim
    in_pad = input_dim          # x is fed unpadded; only the N side is lane-padded

    for h in hidden_dims:
        key, kw, kb = jax.random.split(key, 3)
        bound = 1.0 / (in_dim ** 0.5)
        w = jax.random.uniform(kw, (in_dim, h), jnp.float32, -bound, bound)
        b = jax.random.uniform(kb, (h,), jnp.float32, -bound, bound)
        # BatchNorm1d eval-mode stats.
        gamma = jnp.ones((h,), jnp.float32)
        beta = jnp.zeros((h,), jnp.float32)
        running_mean = jnp.zeros((h,), jnp.float32)
        running_var = jnp.ones((h,), jnp.float32)
        scale = gamma / jnp.sqrt(running_var + eps)
        shift_bn = beta - running_mean * scale

        w_folded = w * scale[None, :]
        shift = b * scale + shift_bn

        out_pad = _round_up(h, LANE)
        w_p = jnp.zeros((in_pad, out_pad), jnp.float32).at[:in_dim, :h].set(w_folded)
        s_p = jnp.zeros((1, out_pad), jnp.float32).at[0, :h].set(shift)
        k_hidden.append((w_p.astype(jnp.bfloat16), s_p))
        r_hidden.append(dict(w=w, b=b, scale=scale, shift=shift_bn))

        in_dim, in_pad = h, out_pad

    k_out, r_out = None, None
    if output_layer:
        key, kw, kb = jax.random.split(key, 3)
        bound = 1.0 / (in_dim ** 0.5)
        w = jax.random.uniform(kw, (in_dim, 1), jnp.float32, -bound, bound)
        b = jax.random.uniform(kb, (1,), jnp.float32, -bound, bound)
        w_p = jnp.zeros((in_pad, LANE), jnp.float32).at[:in_dim, :1].set(w)
        b_p = jnp.zeros((1, LANE), jnp.float32).at[0, :1].set(b)
        k_out = (w_p.astype(jnp.bfloat16), b_p)
        r_out = dict(w=w, b=b)

    return dict(hidden=tuple(k_hidden), out=k_out), dict(hidden=r_hidden, out=r_out)


# ------------------------------ forward pass -------------------------------- #

@functools.partial(jax.jit, static_argnames=("out_dim",))
def mlp_forward(x, hidden_params, out_params, out_dim):
    """Forward pass matching MultiLayerPerceptron.forward (eval mode)."""
    B, D = x.shape
    n_hidden = len(hidden_params)
    has_out = out_params is not None

    # Batch tiling: >=2 grid steps when the batch allows (v7x dual TensorCore),
    # tiles capped at 512 rows; tiny batches use a single full-batch tile
    # (block shape == full array dims -> always layout-legal).
    if B >= 2 * ROW:
        TB = min(512, _round_up(pl.cdiv(B, 2), ROW))
        B_pad = _round_up(B, TB)
    else:
        TB = B
        B_pad = B
    grid = B_pad // TB

    # bf16 input stream (MXU operands are bf16 anyway) -> half the HBM traffic.
    x_bf = x.astype(jnp.bfloat16)
    if B_pad != B:
        x_bf = jnp.pad(x_bf, ((0, B_pad - B), (0, 0)))

    operands = [x_bf]
    in_specs = [pl.BlockSpec((TB, D), lambda i: (i, 0))]
    flops = 0
    weight_bytes = 0
    for w, s in hidden_params:
        operands += [w, s]
        in_specs += [pl.BlockSpec(w.shape, lambda i: (0, 0)),
                     pl.BlockSpec(s.shape, lambda i: (0, 0))]
        flops += 2 * B_pad * w.shape[0] * w.shape[1]
        weight_bytes += w.size * 2 + s.size * 4
    if has_out:
        w_o, b_o = out_params
        operands += [w_o, b_o]
        in_specs += [pl.BlockSpec(w_o.shape, lambda i: (0, 0)),
                     pl.BlockSpec(b_o.shape, lambda i: (0, 0))]
        flops += 2 * B_pad * w_o.shape[0] * w_o.shape[1]
        weight_bytes += w_o.size * 2 + b_o.size * 4
        out_shape = jax.ShapeDtypeStruct((grid, 1, TB), jnp.float32)
        out_spec = pl.BlockSpec((1, 1, TB), lambda i: (i, 0, 0))
        out_bytes = grid * TB * 4
    else:
        h_pad = hidden_params[-1][0].shape[1] if n_hidden else D
        out_shape = jax.ShapeDtypeStruct((B_pad, h_pad), jnp.float32)
        out_spec = pl.BlockSpec((TB, h_pad), lambda i: (i, 0))
        out_bytes = B_pad * h_pad * 4

    bytes_accessed = x_bf.size * 2 + weight_bytes + out_bytes

    kernel = _make_fused_mlp_kernel(n_hidden, has_out)
    out = pl.pallas_call(
        kernel,
        out_shape=out_shape,
        grid=(grid,),
        in_specs=in_specs,
        out_specs=out_spec,
        compiler_params=pltpu.CompilerParams(
            dimension_semantics=("parallel",),
            vmem_limit_bytes=48 * 1024 * 1024),
        cost_estimate=pl.CostEstimate(
            flops=int(flops), transcendentals=0,
            bytes_accessed=int(bytes_accessed)),
    )(*operands)

    if has_out:
        return out.reshape(grid * TB)[:B].reshape(B, 1)
    return out[:B, :out_dim]


# ----------------------------------- main ----------------------------------- #

if __name__ == "__main__":
    key = jax.random.PRNGKey(0)
    kx, kp = jax.random.split(key)

    batch = 8
    input_dim = 32
    hidden_dims = [64, 32]
    dropout = 0.2  # eval mode -> identity (see TODO)

    x = jax.random.normal(kx, (batch, input_dim), jnp.float32)
    kernel_params, ref_params = init_mlp_params(kp, input_dim, hidden_dims,
                                                output_layer=True)

    y = mlp_forward(x, kernel_params["hidden"], kernel_params["out"], out_dim=1)
    y = jax.block_until_ready(y)

    assert y.shape == (batch, 1), y.shape
    assert y.dtype == jnp.float32, y.dtype

    # --- Reference 1: mirror of the kernel math (bf16 MXU operands, padded W). ---
    def mirror_ref(x, hidden_params, out_params):
        h = x.astype(jnp.bfloat16)
        for w, s in hidden_params:
            z = jnp.dot(h, w, preferred_element_type=jnp.float32) + s
            h = jnp.maximum(z, 0.0).astype(jnp.bfloat16)
        w, b = out_params
        z = jnp.dot(h, w, preferred_element_type=jnp.float32) + b
        return z[:, :1]

    y_mirror = mirror_ref(x, kernel_params["hidden"], kernel_params["out"])
    assert jnp.allclose(y, y_mirror, atol=1e-3, rtol=1e-3), (
        float(jnp.max(jnp.abs(y - y_mirror))))

    # --- Reference 2: full-precision unfolded semantics (Linear->BN->ReLU). ---
    def full_ref(x, hp, op):
        h = x
        for p in hp:
            h = (h @ p["w"] + p["b"]) * p["scale"] + p["shift"]
            h = jnp.maximum(h, 0.0)
        return h @ op["w"] + op["b"]

    y_full = full_ref(x, ref_params["hidden"], ref_params["out"])
    assert jnp.allclose(y, y_full, atol=5e-2, rtol=5e-2), (
        float(jnp.max(jnp.abs(y - y_full))))

    print("KERNEL_OK")
</pallas_src>

<mosaic_0001>
module attributes {stable_mosaic.version = 11 : i64} {
  func.func @kernel(%arg0: i32, %arg1: memref<8x32xbf16, #tpu.memory_space<vmem>>, %arg2: memref<32x128xbf16, #tpu.memory_space<vmem>>, %arg3: memref<1x128xf32, #tpu.memory_space<vmem>>, %arg4: memref<128x128xbf16, #tpu.memory_space<vmem>>, %arg5: memref<1x128xf32, #tpu.memory_space<vmem>>, %arg6: memref<128x128xbf16, #tpu.memory_space<vmem>>, %arg7: memref<1x128xf32, #tpu.memory_space<vmem>>, %arg8: memref<1x1x8xf32, #tpu.memory_space<vmem>>) attributes {dimension_semantics = [#tpu.dimension_semantics<parallel>], iteration_bounds = array<i64: 1>, scalar_prefetch = 0 : i64, scratch_operands = 0 : i64, tpu.core_type = #tpu.core_type<tc>, window_params = [{transform_indices = @transform_0, window_bounds = array<i64: 8, 32>}, {pipeline_mode = #tpu.pipeline_mode<synchronous>, transform_indices = @transform_1, window_bounds = array<i64: 32, 128>}, {pipeline_mode = #tpu.pipeline_mode<synchronous>, transform_indices = @transform_2, window_bounds = array<i64: 1, 128>}, {pipeline_mode = #tpu.pipeline_mode<synchronous>, transform_indices = @transform_3, window_bounds = array<i64: 128, 128>}, {pipeline_mode = #tpu.pipeline_mode<synchronous>, transform_indices = @transform_4, window_bounds = array<i64: 1, 128>}, {pipeline_mode = #tpu.pipeline_mode<synchronous>, transform_indices = @transform_5, window_bounds = array<i64: 128, 128>}, {pipeline_mode = #tpu.pipeline_mode<synchronous>, transform_indices = @transform_6, window_bounds = array<i64: 1, 128>}, {transform_indices = @transform_7, window_bounds = array<i64: 1, 1, 8>}]} {
    %c0 = arith.constant 0 : index
    %c0_0 = arith.constant 0 : index
    %0 = vector.load %arg1[%c0, %c0_0] : memref<8x32xbf16, #tpu.memory_space<vmem>>, vector<8x32xbf16>
    %c0_1 = arith.constant 0 : index
    %c0_2 = arith.constant 0 : index
    %1 = vector.load %arg2[%c0_1, %c0_2] : memref<32x128xbf16, #tpu.memory_space<vmem>>, vector<32x128xbf16>
    %cst = arith.constant dense<0.000000e+00> : vector<8x128xf32>
    %2 = tpu.matmul %0, %1, %cst {dimension_numbers = #tpu.dot_dimension_numbers<[1], [0], [0], [1], [0, 0, 1, 1], [], []>} : vector<8x32xbf16>, vector<32x128xbf16>, vector<8x128xf32> -> vector<8x128xf32>
    %c0_3 = arith.constant 0 : index
    %c0_4 = arith.constant 0 : index
    %3 = vector.load %arg3[%c0_3, %c0_4] : memref<1x128xf32, #tpu.memory_space<vmem>>, vector<1x128xf32>
    %4 = vector.broadcast %3 : vector<1x128xf32> to vector<8x128xf32>
    %5 = arith.addf %2, %4 : vector<8x128xf32>
    %cst_5 = arith.constant 0.000000e+00 : f32
    %6 = vector.broadcast %cst_5 : f32 to vector<8x128xf32>
    %7 = arith.maximumf %5, %6 : vector<8x128xf32>
    %8 = arith.truncf %7 : vector<8x128xf32> to vector<8x128xbf16>
    %c0_6 = arith.constant 0 : index
    %c0_7 = arith.constant 0 : index
    %9 = vector.load %arg4[%c0_6, %c0_7] : memref<128x128xbf16, #tpu.memory_space<vmem>>, vector<128x128xbf16>
    %cst_8 = arith.constant dense<0.000000e+00> : vector<8x128xf32>
    %10 = tpu.matmul %8, %9, %cst_8 {dimension_numbers = #tpu.dot_dimension_numbers<[1], [0], [0], [1], [0, 0, 1, 1], [], []>} : vector<8x128xbf16>, vector<128x128xbf16>, vector<8x128xf32> -> vector<8x128xf32>
    %c0_9 = arith.constant 0 : index
    %c0_10 = arith.constant 0 : index
    %11 = vector.load %arg5[%c0_9, %c0_10] : memref<1x128xf32, #tpu.memory_space<vmem>>, vector<1x128xf32>
    %12 = vector.broadcast %11 : vector<1x128xf32> to vector<8x128xf32>
    %13 = arith.addf %10, %12 : vector<8x128xf32>
    %cst_11 = arith.constant 0.000000e+00 : f32
    %14 = vector.broadcast %cst_11 : f32 to vector<8x128xf32>
    %15 = arith.maximumf %13, %14 : vector<8x128xf32>
    %16 = arith.truncf %15 : vector<8x128xf32> to vector<8x128xbf16>
    %c0_12 = arith.constant 0 : index
    %c0_13 = arith.constant 0 : index
    %17 = vector.load %arg6[%c0_12, %c0_13] : memref<128x128xbf16, #tpu.memory_space<vmem>>, vector<128x128xbf16>
    %cst_14 = arith.constant dense<0.000000e+00> : vector<8x128xf32>
    %18 = tpu.matmul %16, %17, %cst_14 {dimension_numbers = #tpu.dot_dimension_numbers<[1], [0], [0], [1], [0, 0, 1, 1], [], []>} : vector<8x128xbf16>, vector<128x128xbf16>, vector<8x128xf32> -> vector<8x128xf32>
    %c0_15 = arith.constant 0 : index
    %c0_16 = arith.constant 0 : index
    %19 = vector.load %arg7[%c0_15, %c0_16] : memref<1x128xf32, #tpu.memory_space<vmem>>, vector<1x128xf32>
    %20 = vector.broadcast %19 : vector<1x128xf32> to vector<8x128xf32>
    %21 = arith.addf %18, %20 : vector<8x128xf32>
    %22 = tpu.transpose %21, [1, 0] : vector<8x128xf32> -> vector<128x8xf32>
    %23 = vector.extract_strided_slice %22 {offsets = [0, 0], sizes = [1, 8], strides = [1, 1]} : vector<128x8xf32> to vector<1x8xf32>
    %24 = vector.shape_cast %23 : vector<1x8xf32> to vector<1x1x8xf32>
    %c0_17 = arith.constant 0 : index
    %c0_18 = arith.constant 0 : index
    %c0_19 = arith.constant 0 : index
    %25 = vector.load %arg8[%c0_17, %c0_18, %c0_19] : memref<1x1x8xf32, #tpu.memory_space<vmem>>, vector<1x1x8xf32>
    tpu.vector_store %arg8[%c0_17, %c0_18, %c0_19], %24 {strides = array<i32>} : memref<1x1x8xf32, #tpu.memory_space<vmem>>, vector<1x1x8xf32>,
    return
  }
  func.func @transform_0(%arg0: i32) -> (i32, i32) {
    %c0_i32 = arith.constant 0 : i32
    %c0_i32_0 = arith.constant 0 : i32
    return %arg0, %c0_i32 : i32, i32
  }
  func.func @transform_1(%arg0: i32) -> (i32, i32) {
    %c0_i32 = arith.constant 0 : i32
    %c0_i32_0 = arith.constant 0 : i32
    %c0_i32_1 = arith.constant 0 : i32
    return %c0_i32, %c0_i32_0 : i32, i32
  }
  func.func @transform_2(%arg0: i32) -> (i32, i32) {
    %c0_i32 = arith.constant 0 : i32
    %c0_i32_0 = arith.constant 0 : i32
    %c0_i32_1 = arith.constant 0 : i32
    return %c0_i32, %c0_i32_0 : i32, i32
  }
  func.func @transform_3(%arg0: i32) -> (i32, i32) {
    %c0_i32 = arith.constant 0 : i32
    %c0_i32_0 = arith.constant 0 : i32
    %c0_i32_1 = arith.constant 0 : i32
    return %c0_i32, %c0_i32_0 : i32, i32
  }
  func.func @transform_4(%arg0: i32) -> (i32, i32) {
    %c0_i32 = arith.constant 0 : i32
    %c0_i32_0 = arith.constant 0 : i32
    %c0_i32_1 = arith.constant 0 : i32
    return %c0_i32, %c0_i32_0 : i32, i32
  }
  func.func @transform_5(%arg0: i32) -> (i32, i32) {
    %c0_i32 = arith.constant 0 : i32
    %c0_i32_0 = arith.constant 0 : i32
    %c0_i32_1 = arith.constant 0 : i32
    return %c0_i32, %c0_i32_0 : i32, i32
  }
  func.func @transform_6(%arg0: i32) -> (i32, i32) {
    %c0_i32 = arith.constant 0 : i32
    %c0_i32_0 = arith.constant 0 : i32
    %c0_i32_1 = arith.constant 0 : i32
    return %c0_i32, %c0_i32_0 : i32, i32
  }
  func.func @transform_7(%arg0: i32) -> (i32, i32, i32) {
    %c0_i32 = arith.constant 0 : i32
    %c0_i32_0 = arith.constant 0 : i32
    %c0_i32_1 = arith.constant 0 : i32
    return %arg0, %c0_i32, %c0_i32_0 : i32, i32, i32
  }
}

</mosaic_0001>

<llo_original>
// kernel: mlp_forward.1
$region0: #{mlp_forward.1}
  #allocation0 [shape = 'u32[]', space=smem, size = 0x4, offset = 0x4, fixed_abs, tag = 'smem constant byte address 0x4 - core index']
  #allocation1 [shape = 'u32[72,128]{1,0:T(1,128)}', space=vmem, size = 0x9000, scoped, tag = 'internal scratch']
  %s0 = inlined_call_operand.vmem [shape: bf16[8,32], index: 0, kind: input, shape index: {}]
  %s1 = inlined_call_operand.hbm [shape: bf16[32,128], index: 1, kind: input, shape index: {}]
  %s2 = inlined_call_operand.vmem [shape: f32[1,128], index: 2, kind: input, shape index: {}]
  %s3 = inlined_call_operand.hbm [shape: bf16[128,128], index: 3, kind: input, shape index: {}]
  %s4 = inlined_call_operand.vmem [shape: f32[1,128], index: 4, kind: input, shape index: {}]
  %s5 = inlined_call_operand.hbm [shape: bf16[128,128], index: 5, kind: input, shape index: {}]
  %s6 = inlined_call_operand.vmem [shape: f32[1,128], index: 6, kind: input, shape index: {}]
  %s7 = inlined_call_operand.hbm [shape: f32[1,1,8], index: 7, kind: output, shape index: {}]
  %s8 = sld [smem:[#allocation0]]
  $region50: #{mlp_forward.1} parent=0
    _
  %s10 = ssub.s32 1, %s8
  %s11 = scalar_select 0, %s10, %s8
  $region1: #{mlp_forward.1} parent=0
    #allocation2 [shape = 'u8[8192]{0}', space=vmem, size = 0x2000, scoped, tag = 'input window, operand 1, single buffered']
    #allocation3 [shape = 's32[1]{0}', space=sflag, size = 0x4, scoped, tag = 'scoped memory for mlp_forward.1']
    #allocation4 [shape = 's32[1]{0}', space=sflag, size = 0x4, scoped, tag = 'scoped memory for mlp_forward.1']
    #allocation5 [shape = 'u8[32768]{0}', space=vmem, size = 0x8000, scoped, tag = 'input window, operand 3, single buffered']
    #allocation6 [shape = 's32[1]{0}', space=sflag, size = 0x4, scoped, tag = 'scoped memory for mlp_forward.1']
    #allocation7 [shape = 'u8[32768]{0}', space=vmem, size = 0x8000, scoped, tag = 'input window, operand 5, single buffered']
    #allocation8 [shape = 'u8[512]{0}', space=vmem, size = 0x400, scoped, tag = 'output window, operand 0, single buffered']
    %12 = vsyncpa [#allocation3], 0
    %13 = vsyncpa [#allocation6], 0
    %14 = vsyncpa [#allocation4], 0
    // Predicated region
    $region2: #{mlp_forward.1} parent=1 // pred_check
      _
    $region3: #{mlp_forward.1} parent=1 // pred_check_branch
      %16 = sbr.rel (0) target = $region5
    $region4: #{mlp_forward.1} parent=1 // pred_region
      _
    $region5: #{mlp_forward.1} parent=1 // pred_fallthru
      _
    // Predicated region
    $region6: #{mlp_forward.1} parent=1 // pred_check
      _
    $region7: #{mlp_forward.1} parent=1 // pred_check_branch
      %18 = sbr.rel (0) target = $region9
    $region8: #{mlp_forward.1} parent=1 // pred_region
      %20 = vsyncadd [#allocation3], 0
      %s21 = sshll.u32 %s1, 4
      %s22 = int_to_ptr.hbm [resolvable:$true] %s21
      %s23 = sshll.u32 [#allocation2], 4
      %s24 = int_to_ptr.vmem [resolvable:$true] %s23
      %29 = dma.hbm_to_vmem [thread:$0]  %s22, 256, %s24, [#allocation3], 64, 64, 4
    $region9: #{mlp_forward.1} parent=1 // pred_fallthru
      _
    // Predicated region
    $region10: #{mlp_forward.1} parent=1 // pred_check
      _
    $region11: #{mlp_forward.1} parent=1 // pred_check_branch
      %31 = sbr.rel (0) target = $region13
    $region12: #{mlp_forward.1} parent=1 // pred_region
      _
    $region13: #{mlp_forward.1} parent=1 // pred_fallthru
      _
    // Predicated region
    $region14: #{mlp_forward.1} parent=1 // pred_check
      _
    $region15: #{mlp_forward.1} parent=1 // pred_check_branch
      %33 = sbr.rel (0) target = $region17
    $region16: #{mlp_forward.1} parent=1 // pred_region
      %35 = vsyncadd [#allocation6], 0
      %s36 = sshll.u32 %s3, 4
      %s37 = int_to_ptr.hbm [resolvable:$true] %s36
      %s38 = sshll.u32 [#allocation5], 4
      %s39 = int_to_ptr.vmem [resolvable:$true] %s38
      %44 = dma.hbm_to_vmem [thread:$0]  %s37, 1024, %s39, [#allocation6], 64, 64, 4
    $region17: #{mlp_forward.1} parent=1 // pred_fallthru
      _
    // Predicated region
    $region18: #{mlp_forward.1} parent=1 // pred_check
      _
    $region19: #{mlp_forward.1} parent=1 // pred_check_branch
      %46 = sbr.rel (0) target = $region21
    $region20: #{mlp_forward.1} parent=1 // pred_region
      _
    $region21: #{mlp_forward.1} parent=1 // pred_fallthru
      _
    // Predicated region
    $region22: #{mlp_forward.1} parent=1 // pred_check
      _
    $region23: #{mlp_forward.1} parent=1 // pred_check_branch
      %48 = sbr.rel (0) target = $region25
    $region24: #{mlp_forward.1} parent=1 // pred_region
      %50 = vsyncadd [#allocation6], 0
      %s51 = sshll.u32 %s5, 4
      %s52 = int_to_ptr.hbm [resolvable:$true] %s51
      %s53 = sshll.u32 [#allocation7], 4
      %s54 = int_to_ptr.vmem [resolvable:$true] %s53
      %59 = dma.hbm_to_vmem [thread:$0]  %s52, 1024, %s54, [#allocation6], 64, 64, 4
    $region25: #{mlp_forward.1} parent=1 // pred_fallthru
      _
    // Predicated region
    $region26: #{mlp_forward.1} parent=1 // pred_check
      _
    $region27: #{mlp_forward.1} parent=1 // pred_check_branch
      %61 = sbr.rel (0) target = $region29
    $region28: #{mlp_forward.1} parent=1 // pred_region
      _
    $region29: #{mlp_forward.1} parent=1 // pred_fallthru
      _
    // Predicated region
    $region30: #{mlp_forward.1} parent=1 // pred_check
      _
    $region31: #{mlp_forward.1} parent=1 // pred_check_branch
      %63 = sbr.rel (0) target = $region33
    $region32: #{mlp_forward.1} parent=1 // pred_region
      %65 = dma.done [#allocation3], 256
    $region33: #{mlp_forward.1} parent=1 // pred_fallthru
      _
    // Predicated region
    $region34: #{mlp_forward.1} parent=1 // pred_check
      _
    $region35: #{mlp_forward.1} parent=1 // pred_check_branch
      %67 = sbr.rel (0) target = $region37
    $region36: #{mlp_forward.1} parent=1 // pred_region
      %69 = dma.done [#allocation6], 1024
    $region37: #{mlp_forward.1} parent=1 // pred_fallthru
      _
    // Predicated region
    $region38: #{mlp_forward.1} parent=1 // pred_check
      _
    $region39: #{mlp_forward.1} parent=1 // pred_check_branch
      %71 = sbr.rel (0) target = $region41
    $region40: #{mlp_forward.1} parent=1 // pred_region
      %73 = dma.done [#allocation6], 1024
    $region41: #{mlp_forward.1} parent=1 // pred_fallthru
      _
    %v75 = vld [vmem:[%s0] sm:$0xf]
    %v76 = vld [vmem:[#allocation2] sm:$0xf]
    %v77 = vld [vmem:[#allocation2 + $0x4] sm:$0xf]
    %v78 = vld [vmem:[#allocation2 + $0x8] sm:$0xf]
    %v79 = vld [vmem:[#allocation2 + $0xc] sm:$0xf]
    %v80 = vld [vmem:[%s2] sm:$0x1]
    %v82 = vperm.slane %v80, 0
    %v88 = vunpack.c.l.b16 %v76
    %v89 = vunpack.c.l.b16 %v77
    %v90 = vunpack.c.l.b16 %v78
    %v91 = vunpack.c.l.b16 %v79
    %v92 = vpack.c.b16 %v89, %v88
    %v93 = vpack.c.b16 %v91, %v90
    %vm96 = vcmask 261120
    %v98 = vsel %vm96, %v75, 0
    %100 = vmatpush.bf16.msra.mxu0 0
    %101 = vmatpush.bf16.msra.mxu0 0
    %102 = vmatpush.bf16.msra.mxu0 0
    %103 = vmatpush.bf16.msra.mxu0 0
    %104 = vmatpush.bf16.msra.mxu0 0
    %105 = vmatpush.bf16.msra.mxu0 0
    %106 = vmatpush.bf16.msra.mxu0 %v93
    %107 = vmatpush.bf16.msra.mxu0 %v92
    %108 = vmatmul.bf16.gmra.mxu0 %v98
    %v109 = vpop.f32.mrf.mxu0
    %v110 = vadd.f32 %v82, %v109
    %v111 = vpop.f32.mrf.mxu0
    %112 = vdwg.mxu0
    %v113 = vmax.f32 %v110, 0.0
    %v114 = vpack.c.bf16 %v113, %v113
    %v115 = vld [vmem:[#allocation5] sm:$0xf]
    %v116 = vld [vmem:[#allocation5 + $0x4] sm:$0xf]
    %v117 = vld [vmem:[#allocation5 + $0x8] sm:$0xf]
    %v118 = vld [vmem:[#allocation5 + $0xc] sm:$0xf]
    %v119 = vld [vmem:[#allocation5 + $0x10] sm:$0xf]
    %v120 = vld [vmem:[#allocation5 + $0x14] sm:$0xf]
    %v121 = vld [vmem:[#allocation5 + $0x18] sm:$0xf]
    %v122 = vld [vmem:[#allocation5 + $0x1c] sm:$0xf]
    %v123 = vld [vmem:[#allocation5 + $0x20] sm:$0xf]
    %v124 = vld [vmem:[#allocation5 + $0x24] sm:$0xf]
    %v125 = vld [vmem:[#allocation5 + $0x28] sm:$0xf]
    %v126 = vld [vmem:[#allocation5 + $0x2c] sm:$0xf]
    %v127 = vld [vmem:[#allocation5 + $0x30] sm:$0xf]
    %v128 = vld [vmem:[#allocation5 + $0x34] sm:$0xf]
    %v129 = vld [vmem:[#allocation5 + $0x38] sm:$0xf]
    %v130 = vld [vmem:[#allocation5 + $0x3c] sm:$0xf]
    %v131 = vld [vmem:[%s4] sm:$0x1]
    %v133 = vperm.slane %v131, 0
    %v151 = vunpack.c.l.b16 %v115
    %v152 = vunpack.c.l.b16 %v116
    %v153 = vunpack.c.l.b16 %v117
    %v154 = vunpack.c.l.b16 %v118
    %v155 = vunpack.c.l.b16 %v119
    %v156 = vunpack.c.l.b16 %v120
    %v157 = vunpack.c.l.b16 %v121
    %v158 = vunpack.c.l.b16 %v122
    %v159 = vunpack.c.l.b16 %v123
    %v160 = vunpack.c.l.b16 %v124
    %v161 = vunpack.c.l.b16 %v125
    %v162 = vunpack.c.l.b16 %v126
    %v163 = vunpack.c.l.b16 %v127
    %v164 = vunpack.c.l.b16 %v128
    %v165 = vunpack.c.l.b16 %v129
    %v166 = vunpack.c.l.b16 %v130
    %v167 = vpack.c.b16 %v152, %v151
    %v168 = vpack.c.b16 %v154, %v153
    %v169 = vpack.c.b16 %v156, %v155
    %v170 = vpack.c.b16 %v158, %v157
    %v171 = vpack.c.b16 %v160, %v159
    %v172 = vpack.c.b16 %v162, %v161
    %v173 = vpack.c.b16 %v164, %v163
    %v174 = vpack.c.b16 %v166, %v165
    %183 = vmatpush.bf16.msra.mxu0 %v174
    %184 = vmatpush.bf16.msra.mxu0 %v173
    %185 = vmatpush.bf16.msra.mxu0 %v172
    %186 = vmatpush.bf16.msra.mxu0 %v171
    %187 = vmatpush.bf16.msra.mxu0 %v170
    %188 = vmatpush.bf16.msra.mxu0 %v169
    %189 = vmatpush.bf16.msra.mxu0 %v168
    %190 = vmatpush.bf16.msra.mxu0 %v167
    %191 = vmatmul.bf16.gmra.mxu0 %v114
    %v192 = vpop.f32.mrf.mxu0
    %v193 = vadd.f32 %v133, %v192
    %v194 = vpop.f32.mrf.mxu0
    %195 = vdwg.mxu0
    %v196 = vmax.f32 %v193, 0.0
    %v197 = vpack.c.bf16 %v196, %v196
    %v198 = vld [vmem:[#allocation7] sm:$0xf]
    %v199 = vld [vmem:[#allocation7 + $0x4] sm:$0xf]
    %v200 = vld [vmem:[#allocation7 + $0x8] sm:$0xf]
    %v201 = vld [vmem:[#allocation7 + $0xc] sm:$0xf]
    %v202 = vld [vmem:[#allocation7 + $0x10] sm:$0xf]
    %v203 = vld [vmem:[#allocation7 + $0x14] sm:$0xf]
    %v204 = vld [vmem:[#allocation7 + $0x18] sm:$0xf]
    %v205 = vld [vmem:[#allocation7 + $0x1c] sm:$0xf]
    %v206 = vld [vmem:[#allocation7 + $0x20] sm:$0xf]
    %v207 = vld [vmem:[#allocation7 + $0x24] sm:$0xf]
    %v208 = vld [vmem:[#allocation7 + $0x28] sm:$0xf]
    %v209 = vld [vmem:[#allocation7 + $0x2c] sm:$0xf]
    %v210 = vld [vmem:[#allocation7 + $0x30] sm:$0xf]
    %v211 = vld [vmem:[#allocation7 + $0x34] sm:$0xf]
    %v212 = vld [vmem:[#allocation7 + $0x38] sm:$0xf]
    %v213 = vld [vmem:[#allocation7 + $0x3c] sm:$0xf]
    %v214 = vld [vmem:[%s6] sm:$0x1]
    %v216 = vperm.slane %v214, 0
    %v234 = vunpack.c.l.b16 %v198
    %v235 = vunpack.c.l.b16 %v199
    %v236 = vunpack.c.l.b16 %v200
    %v237 = vunpack.c.l.b16 %v201
    %v238 = vunpack.c.l.b16 %v202
    %v239 = vunpack.c.l.b16 %v203
    %v240 = vunpack.c.l.b16 %v204
    %v241 = vunpack.c.l.b16 %v205
    %v242 = vunpack.c.l.b16 %v206
    %v243 = vunpack.c.l.b16 %v207
    %v244 = vunpack.c.l.b16 %v208
    %v245 = vunpack.c.l.b16 %v209
    %v246 = vunpack.c.l.b16 %v210
    %v247 = vunpack.c.l.b16 %v211
    %v248 = vunpack.c.l.b16 %v212
    %v249 = vunpack.c.l.b16 %v213
    %v250 = vpack.c.b16 %v235, %v234
    %v251 = vpack.c.b16 %v237, %v236
    %v252 = vpack.c.b16 %v239, %v238
    %v253 = vpack.c.b16 %v241, %v240
    %v254 = vpack.c.b16 %v243, %v242
    %v255 = vpack.c.b16 %v245, %v244
    %v256 = vpack.c.b16 %v247, %v246
    %v257 = vpack.c.b16 %v249, %v248
    %266 = vmatpush.bf16.msra.mxu0 %v257
    %267 = vmatpush.bf16.msra.mxu0 %v256
    %268 = vmatpush.bf16.msra.mxu0 %v255
    %269 = vmatpush.bf16.msra.mxu0 %v254
    %270 = vmatpush.bf16.msra.mxu0 %v253
    %271 = vmatpush.bf16.msra.mxu0 %v252
    %272 = vmatpush.bf16.msra.mxu0 %v251
    %273 = vmatpush.bf16.msra.mxu0 %v250
    %274 = vmatmul.bf16.gmra.mxu0 %v197
    %v275 = vpop.f32.mrf.mxu0
    %v276 = vadd.f32 %v216, %v275
    %v277 = vpop.f32.mrf.mxu0
    %278 = vdwg.mxu0
    %279 = vxpose.xlu0.b32.start [1/16] %v276, 128
    %280 = vxpose.xlu0.b32.cont [2/16] 0.0, 128
    %281 = vxpose.xlu0.b32.cont [3/16] 0.0, 128
    %282 = vxpose.xlu0.b32.cont [4/16] 0.0, 128
    %283 = vxpose.xlu0.b32.cont [5/16] 0.0, 128
    %284 = vxpose.xlu0.b32.cont [6/16] 0.0, 128
    %285 = vxpose.xlu0.b32.cont [7/16] 0.0, 128
    %286 = vxpose.xlu0.b32.cont [8/16] 0.0, 128
    %287 = vxpose.xlu0.b32.cont [9/16] 0.0, 128
    %288 = vxpose.xlu0.b32.cont [10/16] 0.0, 128
    %289 = vxpose.xlu0.b32.cont [11/16] 0.0, 128
    %290 = vxpose.xlu0.b32.cont [12/16] 0.0, 128
    %291 = vxpose.xlu0.b32.cont [13/16] 0.0, 128
    %292 = vxpose.xlu0.b32.cont [14/16] 0.0, 128
    %293 = vxpose.xlu0.b32.cont [15/16] 0.0, 128
    %294 = vxpose.xlu0.b32.end [16/16] 0.0, 128
    %v295 = vpop.trf.xlu0
    %v296 = vpop.trf.xlu0
    %v297 = vpop.trf.xlu0
    %v298 = vpop.trf.xlu0
    %v299 = vpop.trf.xlu0
    %v300 = vpop.trf.xlu0
    %v301 = vpop.trf.xlu0
    %v302 = vpop.trf.xlu0
    %v303 = vpop.trf.xlu0
    %v304 = vpop.trf.xlu0
    %v305 = vpop.trf.xlu0
    %v306 = vpop.trf.xlu0
    %v307 = vpop.trf.xlu0
    %v308 = vpop.trf.xlu0
    %v309 = vpop.trf.xlu0
    %v310 = vpop.trf.xlu0
    %vm311 = vcmask 57344
    %312 = vst.msk [vmem:[#allocation8] sm:$0x1] %vm311, %v295
    // Predicated region
    $region42: #{mlp_forward.1} parent=1 // pred_check
      _
    $region43: #{mlp_forward.1} parent=1 // pred_check_branch
      %314 = sbr.rel (0) target = $region45
    $region44: #{mlp_forward.1} parent=1 // pred_region
      %316 = vsyncadd [#allocation4], 0
      %s318 = sshll.u32 [#allocation8], 4
      %s319 = int_to_ptr.vmem [resolvable:$true] %s318
      %s320 = sshll.u32 %s7, 4
      %s321 = int_to_ptr.hbm [resolvable:$true] %s320
      %323 = dma.vmem_to_hbm [thread:$0]  %s319, 16, %s321, [#allocation4]
    $region45: #{mlp_forward.1} parent=1 // pred_fallthru
      _
    // Predicated region
    $region46: #{mlp_forward.1} parent=1 // pred_check
      _
    $region47: #{mlp_forward.1} parent=1 // pred_check_branch
      %325 = sbr.rel (0) target = $region49
    $region48: #{mlp_forward.1} parent=1 // pred_region
      %327 = dma.done [#allocation4], 16
    $region49: #{mlp_forward.1} parent=1 // pred_fallthru
      _
    %328 = vsyncpa [#allocation3], 1
    %329 = vsyncpa [#allocation6], 1
    %330 = vsyncpa [#allocation4], 1

</llo_original>
